<compile_context>
chip_gen: v7x
topology: tpu7x:2x2x1
jax: 0.10.0
libtpu: 0.0.40
codegen_flags: <defaults>
</compile_context>

<pallas_src>
from typing import Sequence

import jax
import jax.numpy as jnp
from jax.experimental import pallas as pl
from jax.experimental.pallas import tpu as pltpu

TM_MAX = 1024   # output-tile rows cap
TN_MAX = 1024   # output-tile cols cap
TK_MAX = 1024   # reduction-tile cap


def _round_up(x: int, m: int) -> int:
    return ((x + m - 1) // m) * m


def _vmem_capacity_bytes() -> int:
    """Per-core VMEM capacity; conservative fallback = 64 MiB (v7x)."""
    try:
        return int(pltpu.get_tpu_info().vmem_capacity_bytes)
    except Exception:
        return 64 << 20


def _vmem_footprint(tm: int, tn: int, tk: int, out_itemsize: int) -> int:
    """Double-buffered tile footprint + f32 accumulator scratch, in bytes."""
    x_t = tm * tk * 2          # bf16 x tile
    w_t = tk * tn * 2          # bf16 W tile
    o_t = tm * tn * out_itemsize
    b_t = tn * 4               # f32 bias tile
    m_t = tm * 4               # f32 mask tile
    acc = tm * tn * 4          # f32 accumulator (single-buffered scratch)
    return 2 * (x_t + w_t + o_t + b_t + m_t) + acc


def _choose_tn_tk(K: int, N: int, out_itemsize: int, budget: int):
    """Pick tn/tk once per weight (MXU-native 256 multiples when possible)."""
    tn = min(TN_MAX, _round_up(N, 256) if N > 128 else _round_up(N, 128))
    tk = min(TK_MAX, _round_up(K, 256) if K > 128 else _round_up(K, 128))
    # Shrink (conservatively assuming tm = TM_MAX) until it fits the budget.
    while _vmem_footprint(TM_MAX, tn, tk, out_itemsize) > budget:
        if tk > 256:
            tk //= 2
        elif tn > 256:
            tn //= 2
        else:
            break
    return tn, tk


def _choose_tm(M: int, tn: int, tk: int, out_itemsize: int, budget: int) -> int:
    tm = min(TM_MAX, _round_up(M, 16))       # 16 = bf16 sublane packing minimum
    while tm > 16 and _vmem_footprint(tm, tn, tk, out_itemsize) > budget:
        tm = max(16, (tm // 2) // 16 * 16)
    return tm


# --------------------------------------------------------------------------
# Pallas kernel: tiled  out = (x @ W + b) * mask   (mask broadcast over N)
# --------------------------------------------------------------------------
def _masked_linear_kernel(x_ref, w_ref, b_ref, mask_ref, o_ref, acc_ref):
    # Zero the f32 accumulator on the first K step of each output tile.
    @pl.when(pl.program_id(2) == 0)
    def _():
        acc_ref[...] = jnp.zeros_like(acc_ref)

    # bf16 x bf16 -> f32 on the MXU, accumulate in VMEM scratch.
    acc_ref[...] += jnp.dot(x_ref[...], w_ref[...],
                            preferred_element_type=jnp.float32)

    # Bias + mask + downcast applied exactly once, on the last K step.
    @pl.when(pl.program_id(2) == pl.num_programs(2) - 1)
    def _():
        acc = acc_ref[...] + b_ref[...]          # [1, tn]  broadcast over rows
        acc = acc * mask_ref[...]                # [tm, 1]  broadcast over lanes
        o_ref[...] = acc.astype(o_ref.dtype)


def masked_linear(x2d: jnp.ndarray, wp: jnp.ndarray, bp: jnp.ndarray,
                  mask2d: jnp.ndarray, *, n_true: int, tn: int, tk: int,
                  vmem_limit: int) -> jnp.ndarray:
    """out = (x2d @ W + b) * mask2d, with W/b pre-cast+padded to (Kp, Np)."""
    M, K = x2d.shape
    Kp, Np = wp.shape
    assert Kp >= K and Np >= n_true
    assert bp.shape == (1, Np)
    assert mask2d.shape == (M, 1)
    out_dtype = x2d.dtype
    out_itemsize = jnp.dtype(out_dtype).itemsize

    tm = _choose_tm(M, tn, tk, out_itemsize, vmem_limit)
    Mp = _round_up(M, tm)

    # Cast / pad x only when actually needed (avoids an extra HBM pass).
    xb = x2d if x2d.dtype == jnp.bfloat16 else x2d.astype(jnp.bfloat16)
    if (Mp, Kp) != (M, K):
        xb = jnp.pad(xb, ((0, Mp - M), (0, Kp - K)))
    mp = mask2d.astype(jnp.float32)
    if Mp != M:
        mp = jnp.pad(mp, ((0, Mp - M), (0, 0)))

    gm, gn, gk = Mp // tm, Np // tn, Kp // tk

    # Advisory cost: account for the tile re-stream factors.
    cost = pl.CostEstimate(
        flops=2 * Mp * Np * Kp,
        transcendentals=0,
        bytes_accessed=(Mp * Kp * 2 * gn          # x re-read per N tile
                        + Kp * Np * 2 * gm        # W re-read per M tile
                        + Mp * Np * out_itemsize  # output writeback
                        + Np * 4 * gm + Mp * 4 * gn),
    )

    # Put the grid axis with more blocks outermost (v7x: 2 TCs share HBM).
    if gm >= gn:
        grid = (gm, gn, gk)
        x_spec = pl.BlockSpec((tm, tk), lambda i, j, k: (i, k))
        w_spec = pl.BlockSpec((tk, tn), lambda i, j, k: (k, j))
        b_spec = pl.BlockSpec((1, tn), lambda i, j, k: (0, j))
        m_spec = pl.BlockSpec((tm, 1), lambda i, j, k: (i, 0))
        o_spec = pl.BlockSpec((tm, tn), lambda i, j, k: (i, j))
    else:
        grid = (gn, gm, gk)
        x_spec = pl.BlockSpec((tm, tk), lambda jn, im, k: (im, k))
        w_spec = pl.BlockSpec((tk, tn), lambda jn, im, k: (k, jn))
        b_spec = pl.BlockSpec((1, tn), lambda jn, im, k: (0, jn))
        m_spec = pl.BlockSpec((tm, 1), lambda jn, im, k: (im, 0))
        o_spec = pl.BlockSpec((tm, tn), lambda jn, im, k: (im, jn))

    # NOTE: if DMA is still exposed at these tile sizes, add
    # pipeline_mode=pl.Buffered(3) to x_spec / w_spec (costs extra VMEM).
    out = pl.pallas_call(
        _masked_linear_kernel,
        out_shape=jax.ShapeDtypeStruct((Mp, Np), out_dtype),
        grid_spec=pltpu.PrefetchScalarGridSpec(
            num_scalar_prefetch=0,
            grid=grid,
            in_specs=[x_spec, w_spec, b_spec, m_spec],
            out_specs=o_spec,
            scratch_shapes=[pltpu.VMEM((tm, tn), jnp.float32)],
        ),
        compiler_params=pltpu.CompilerParams(
            dimension_semantics=("parallel", "parallel", "arbitrary"),
            vmem_limit_bytes=int(vmem_limit)),
        cost_estimate=cost,
    )(xb, wp, bp, mp)

    if (Mp, Np) != (M, n_true):
        out = out[:M, :n_true]
    return out


# --------------------------------------------------------------------------
# Representative wrapped module (the `module` arg of ActiveKwargs).
# Accepts optional kwargs `attention_mask` / `output_attentions`; returns a
# tuple so that `use_first_output` matters.
# --------------------------------------------------------------------------
class MaskedLinearModule:
    def __init__(self, hidden: int, out_dim: int, dtype=jnp.float32):
        kw, kb = jax.random.split(jax.random.PRNGKey(42))
        self.w = (jax.random.normal(kw, (hidden, out_dim), dtype)
                  / jnp.sqrt(jnp.array(hidden, dtype)))
        self.b = jax.random.normal(kb, (1, out_dim), dtype) * 0.01
        self.hidden, self.out_dim = hidden, out_dim

        # Generation-aware VMEM budget (64 MiB v7x vs 128 MiB v5e/v6e).
        self.vmem_limit = min(int(_vmem_capacity_bytes() * 0.7), 96 << 20)
        out_itemsize = jnp.dtype(dtype).itemsize
        self.tn, self.tk = _choose_tn_tk(hidden, out_dim, out_itemsize,
                                         self.vmem_limit)
        kp = _round_up(hidden, self.tk)
        np_ = _round_up(out_dim, self.tn)
        # Cache the bf16-cast, tile-padded weight/bias ONCE (perf review):
        # no per-forward K*N cast+pad pass over HBM.
        self.wp = jnp.pad(self.w.astype(jnp.bfloat16),
                          ((0, kp - hidden), (0, np_ - out_dim)))
        self.bp = jnp.pad(self.b.astype(jnp.float32),
                          ((0, 0), (0, np_ - out_dim)))

    def __call__(self, x, attention_mask=None, output_attentions=False):
        B, S, H = x.shape
        x2d = x.reshape(B * S, H)
        if attention_mask is None:
            mask2d = jnp.ones((B * S, 1), x.dtype)
        else:
            mask2d = attention_mask.reshape(B * S, 1).astype(x.dtype)
        out2d = masked_linear(x2d, self.wp, self.bp, mask2d,
                              n_true=self.out_dim, tn=self.tn, tk=self.tk,
                              vmem_limit=self.vmem_limit)
        out = out2d.reshape(B, S, self.out_dim)
        aux = jnp.zeros((B, S), x.dtype)  # stand-in for e.g. attention probs
        return (out, aux)


# --------------------------------------------------------------------------
# ActiveKwargs: exact semantics of the PyTorch module's forward.
# --------------------------------------------------------------------------
class ActiveKwargs:
    def __init__(self, module, active_keys: Sequence[str],
                 use_first_output: bool = False):
        self.module = module
        self.active_keys = set(active_keys)
        self.use_first_output = use_first_output

    def __call__(self, input, *args, **kwargs):
        kwargs = {k: v for k, v in kwargs.items() if k in self.active_keys}
        output = self.module(input, *args, **kwargs)
        if self.use_first_output and (not isinstance(output, jnp.ndarray)):
            output = output[0]
        return output


# --------------------------------------------------------------------------
if __name__ == "__main__":
    batch, seq, hidden, out_dim = 2, 8, 32, 32

    key = jax.random.PRNGKey(0)
    kx, km = jax.random.split(key)
    x = jax.random.normal(kx, (batch, seq, hidden), jnp.float32)
    attention_mask = (jax.random.uniform(km, (batch, seq)) > 0.3).astype(jnp.float32)

    inner = MaskedLinearModule(hidden, out_dim)
    layer = ActiveKwargs(inner, active_keys=("attention_mask",),
                         use_first_output=True)

    # 'irrelevant_kwarg' must be filtered out by ActiveKwargs; 'attention_mask'
    # must be passed through.
    out = layer(x, attention_mask=attention_mask, irrelevant_kwarg=123)
    out = jax.block_until_ready(out)
    assert out.shape == (batch, seq, out_dim)

    # Reference in matching (bf16 MXU inputs, f32 accumulate) precision.
    x2d = x.reshape(-1, hidden)
    ref2d = jnp.dot(x2d.astype(jnp.bfloat16), inner.w.astype(jnp.bfloat16),
                    preferred_element_type=jnp.float32) + inner.b
    ref2d = ref2d * attention_mask.reshape(-1, 1)
    ref = ref2d.reshape(batch, seq, out_dim).astype(x.dtype)
    assert jnp.allclose(out, ref, atol=2e-2, rtol=2e-2)

    # Loose sanity check against the full-f32 reference as well.
    ref_f32 = ((x2d @ inner.w + inner.b) * attention_mask.reshape(-1, 1)
               ).reshape(batch, seq, out_dim)
    assert jnp.allclose(out, ref_f32, atol=1e-1, rtol=1e-1)

    print("KERNEL_OK")
</pallas_src>

<mosaic_0001>
module attributes {stable_mosaic.version = 11 : i64} {
  func.func @_masked_linear_kernel(%arg0: i32, %arg1: i32, %arg2: i32, %arg3: memref<16x128xbf16, #tpu.memory_space<vmem>>, %arg4: memref<128x128xbf16, #tpu.memory_space<vmem>>, %arg5: memref<1x128xf32, #tpu.memory_space<vmem>>, %arg6: memref<16x1xf32, #tpu.memory_space<vmem>>, %arg7: memref<16x128xf32, #tpu.memory_space<vmem>>, %arg8: memref<16x128xf32, #tpu.memory_space<vmem>>) attributes {dimension_semantics = [#tpu.dimension_semantics<parallel>, #tpu.dimension_semantics<parallel>, #tpu.dimension_semantics<arbitrary>], iteration_bounds = array<i64: 1, 1, 1>, scalar_prefetch = 0 : i64, scratch_operands = 1 : i64, tpu.core_type = #tpu.core_type<tc>, window_params = [{transform_indices = @transform_0, window_bounds = array<i64: 16, 128>}, {transform_indices = @transform_1, window_bounds = array<i64: 128, 128>}, {transform_indices = @transform_2, window_bounds = array<i64: 1, 128>}, {transform_indices = @transform_3, window_bounds = array<i64: 16, 1>}, {transform_indices = @transform_4, window_bounds = array<i64: 16, 128>}]} {
    %c0_i32 = arith.constant 0 : i32
    %0 = arith.cmpi eq, %arg2, %c0_i32 : i32
    %1 = arith.extui %0 : i1 to i32
    %c0_i32_0 = arith.constant 0 : i32
    %2 = arith.cmpi ne, %1, %c0_i32_0 : i32
    scf.if %2 {
      %cst_10 = arith.constant 0.000000e+00 : f32
      %12 = vector.broadcast %cst_10 : f32 to vector<16x128xf32>
      %c0_11 = arith.constant 0 : index
      %c0_12 = arith.constant 0 : index
      %13 = vector.load %arg8[%c0_11, %c0_12] : memref<16x128xf32, #tpu.memory_space<vmem>>, vector<16x128xf32>
      tpu.vector_store %arg8[%c0_11, %c0_12], %12 {strides = array<i32>} : memref<16x128xf32, #tpu.memory_space<vmem>>, vector<16x128xf32>,
    } else {
    }
    %c0 = arith.constant 0 : index
    %c0_1 = arith.constant 0 : index
    %3 = vector.load %arg8[%c0, %c0_1] : memref<16x128xf32, #tpu.memory_space<vmem>>, vector<16x128xf32>
    %c0_2 = arith.constant 0 : index
    %c0_3 = arith.constant 0 : index
    %4 = vector.load %arg3[%c0_2, %c0_3] : memref<16x128xbf16, #tpu.memory_space<vmem>>, vector<16x128xbf16>
    %c0_4 = arith.constant 0 : index
    %c0_5 = arith.constant 0 : index
    %5 = vector.load %arg4[%c0_4, %c0_5] : memref<128x128xbf16, #tpu.memory_space<vmem>>, vector<128x128xbf16>
    %cst = arith.constant dense<0.000000e+00> : vector<16x128xf32>
    %6 = tpu.matmul %4, %5, %cst {dimension_numbers = #tpu.dot_dimension_numbers<[1], [0], [0], [1], [0, 0, 1, 1], [], []>} : vector<16x128xbf16>, vector<128x128xbf16>, vector<16x128xf32> -> vector<16x128xf32>
    %7 = arith.addf %3, %6 : vector<16x128xf32>
    %c0_6 = arith.constant 0 : index
    %c0_7 = arith.constant 0 : index
    %8 = vector.load %arg8[%c0_6, %c0_7] : memref<16x128xf32, #tpu.memory_space<vmem>>, vector<16x128xf32>
    tpu.vector_store %arg8[%c0_6, %c0_7], %7 {strides = array<i32>} : memref<16x128xf32, #tpu.memory_space<vmem>>, vector<16x128xf32>,
    %c0_i32_8 = arith.constant 0 : i32
    %9 = arith.cmpi eq, %arg2, %c0_i32_8 : i32
    %10 = arith.extui %9 : i1 to i32
    %c0_i32_9 = arith.constant 0 : i32
    %11 = arith.cmpi ne, %10, %c0_i32_9 : i32
    scf.if %11 {
      %c0_10 = arith.constant 0 : index
      %c0_11 = arith.constant 0 : index
      %12 = vector.load %arg8[%c0_10, %c0_11] : memref<16x128xf32, #tpu.memory_space<vmem>>, vector<16x128xf32>
      %c0_12 = arith.constant 0 : index
      %c0_13 = arith.constant 0 : index
      %13 = vector.load %arg5[%c0_12, %c0_13] : memref<1x128xf32, #tpu.memory_space<vmem>>, vector<1x128xf32>
      %14 = vector.broadcast %13 : vector<1x128xf32> to vector<16x128xf32>
      %15 = arith.addf %12, %14 : vector<16x128xf32>
      %c0_14 = arith.constant 0 : index
      %c0_15 = arith.constant 0 : index
      %16 = vector.load %arg6[%c0_14, %c0_15] : memref<16x1xf32, #tpu.memory_space<vmem>>, vector<16x1xf32>
      %17 = vector.broadcast %16 : vector<16x1xf32> to vector<16x128xf32>
      %18 = arith.mulf %15, %17 : vector<16x128xf32>
      %c0_16 = arith.constant 0 : index
      %c0_17 = arith.constant 0 : index
      %19 = vector.load %arg7[%c0_16, %c0_17] : memref<16x128xf32, #tpu.memory_space<vmem>>, vector<16x128xf32>
      tpu.vector_store %arg7[%c0_16, %c0_17], %18 {strides = array<i32>} : memref<16x128xf32, #tpu.memory_space<vmem>>, vector<16x128xf32>,
    } else {
    }
    return
  }
  func.func @transform_0(%arg0: i32, %arg1: i32, %arg2: i32) -> (i32, i32) {
    %c0_i32 = arith.constant 0 : i32
    return %arg0, %arg2 : i32, i32
  }
  func.func @transform_1(%arg0: i32, %arg1: i32, %arg2: i32) -> (i32, i32) {
    %c0_i32 = arith.constant 0 : i32
    return %arg2, %arg1 : i32, i32
  }
  func.func @transform_2(%arg0: i32, %arg1: i32, %arg2: i32) -> (i32, i32) {
    %c0_i32 = arith.constant 0 : i32
    %c0_i32_0 = arith.constant 0 : i32
    return %c0_i32, %arg1 : i32, i32
  }
  func.func @transform_3(%arg0: i32, %arg1: i32, %arg2: i32) -> (i32, i32) {
    %c0_i32 = arith.constant 0 : i32
    %c0_i32_0 = arith.constant 0 : i32
    return %arg0, %c0_i32 : i32, i32
  }
  func.func @transform_4(%arg0: i32, %arg1: i32, %arg2: i32) -> (i32, i32) {
    %c0_i32 = arith.constant 0 : i32
    return %arg0, %arg1 : i32, i32
  }
}

</mosaic_0001>

<llo_original>
// kernel: tpu_custom_call.1
$region0: #{tpu_custom_call.1}
  #allocation0 [shape = 'u32[]', space=smem, size = 0x4, offset = 0x4, fixed_abs, tag = 'smem constant byte address 0x4 - core index']
  #allocation1 [shape = 'u32[144,128]{1,0:T(1,128)}', space=vmem, size = 0x12000, scoped, tag = 'internal scratch']
  #allocation2 [shape = 'f32[16,128]{1,0:T(8,128)}', space=vmem, size = 0x2000, scoped, tag = 'scratch operand']
  %s0 = inlined_call_operand.vmem [shape: bf16[16,128], index: 0, kind: input, shape index: {}]
  %s1 = inlined_call_operand.hbm [shape: bf16[128,128], index: 1, kind: input, shape index: {}]
  %s2 = inlined_call_operand.vmem [shape: f32[1,128], index: 2, kind: input, shape index: {}]
  %s3 = inlined_call_operand.vmem [shape: f32[16,1], index: 3, kind: input, shape index: {}]
  %s4 = inlined_call_operand.hbm [shape: f32[16,128], index: 4, kind: output, shape index: {}]
  %s5 = sld [smem:[#allocation0]]
  $region38: #{tpu_custom_call.1} parent=0
    _
  %s7 = ssub.s32 1, %s5
  %s8 = scalar_select 0, %s7, %s5
  $region1: #{tpu_custom_call.1} parent=0
    #allocation3 [shape = 'u8[32768]{0}', space=vmem, size = 0x8000, scoped, tag = 'input window, operand 1, single buffered']
    #allocation4 [shape = 's32[1]{0}', space=sflag, size = 0x4, scoped, tag = 'scoped memory for tpu_custom_call.1']
    #allocation5 [shape = 's32[1]{0}', space=sflag, size = 0x4, scoped, tag = 'scoped memory for tpu_custom_call.1']
    #allocation6 [shape = 'u8[8192]{0}', space=vmem, size = 0x2000, scoped, tag = 'output window, operand 0, single buffered']
    %9 = vsyncpa [#allocation4], 0
    %10 = vsyncpa [#allocation5], 0
    // Predicated region
    $region2: #{tpu_custom_call.1} parent=1 // pred_check
      _
    $region3: #{tpu_custom_call.1} parent=1 // pred_check_branch
      %12 = sbr.rel (0) target = $region5
    $region4: #{tpu_custom_call.1} parent=1 // pred_region
      _
    $region5: #{tpu_custom_call.1} parent=1 // pred_fallthru
      _
    // Predicated region
    $region6: #{tpu_custom_call.1} parent=1 // pred_check
      _
    $region7: #{tpu_custom_call.1} parent=1 // pred_check_branch
      %14 = sbr.rel (0) target = $region9
    $region8: #{tpu_custom_call.1} parent=1 // pred_region
      %s16 = ssub.s32 1024, 1024
      %17 = vsyncadd [#allocation4], %s16
      %s18 = sshll.u32 [#allocation3], 4
      %s19 = int_to_ptr.vmem [resolvable:$true] %s18
      %24 = dma.hbm_to_vmem [thread:$0]  %s1, 1024, %s19, [#allocation4], 64, 64, 4
    $region9: #{tpu_custom_call.1} parent=1 // pred_fallthru
      _
    // Predicated region
    $region10: #{tpu_custom_call.1} parent=1 // pred_check
      _
    $region11: #{tpu_custom_call.1} parent=1 // pred_check_branch
      %26 = sbr.rel (0) target = $region13
    $region12: #{tpu_custom_call.1} parent=1 // pred_region
      _
    $region13: #{tpu_custom_call.1} parent=1 // pred_fallthru
      _
    // Predicated region
    $region14: #{tpu_custom_call.1} parent=1 // pred_check
      _
    $region15: #{tpu_custom_call.1} parent=1 // pred_check_branch
      %28 = sbr.rel (0) target = $region17
    $region16: #{tpu_custom_call.1} parent=1 // pred_region
      _
    $region17: #{tpu_custom_call.1} parent=1 // pred_fallthru
      _
    // Predicated region
    $region18: #{tpu_custom_call.1} parent=1 // pred_check
      _
    $region19: #{tpu_custom_call.1} parent=1 // pred_check_branch
      %30 = sbr.rel (0) target = $region21
    $region20: #{tpu_custom_call.1} parent=1 // pred_region
      %31 = dma.done [#allocation4], 1024
    $region21: #{tpu_custom_call.1} parent=1 // pred_fallthru
      _
    %p33 = scmp.eq.s32.totalorder 0, 0
    // Predicated region
    $region22: #{tpu_custom_call.1} parent=1 // pred_check
      %p34 = pneg %p33
    $region23: #{tpu_custom_call.1} parent=1 // pred_check_branch
      %36 = sbr.rel (%p34) target = $region25
    $region24: #{tpu_custom_call.1} parent=1 // pred_region
      %37 = vst [vmem:[#allocation2] sm:$0xff] 0.0
      %38 = vst [vmem:[#allocation2 + $0x8] sm:$0xff] 0.0
    $region25: #{tpu_custom_call.1} parent=1 // pred_fallthru
      _
    %v39 = vld [vmem:[#allocation2] sm:$0xff]
    %v40 = vld [vmem:[#allocation2 + $0x8] sm:$0xff]
    %v41 = vld [vmem:[%s0] sm:$0xf]
    %v42 = vld [vmem:[%s0 + $0x4] sm:$0xf]
    %v43 = vld [vmem:[#allocation3] sm:$0xf]
    %v44 = vld [vmem:[#allocation3 + $0x4] sm:$0xf]
    %v45 = vld [vmem:[#allocation3 + $0x8] sm:$0xf]
    %v46 = vld [vmem:[#allocation3 + $0xc] sm:$0xf]
    %v47 = vld [vmem:[#allocation3 + $0x10] sm:$0xf]
    %v48 = vld [vmem:[#allocation3 + $0x14] sm:$0xf]
    %v49 = vld [vmem:[#allocation3 + $0x18] sm:$0xf]
    %v50 = vld [vmem:[#allocation3 + $0x1c] sm:$0xf]
    %v51 = vld [vmem:[#allocation3 + $0x20] sm:$0xf]
    %v52 = vld [vmem:[#allocation3 + $0x24] sm:$0xf]
    %v53 = vld [vmem:[#allocation3 + $0x28] sm:$0xf]
    %v54 = vld [vmem:[#allocation3 + $0x2c] sm:$0xf]
    %v55 = vld [vmem:[#allocation3 + $0x30] sm:$0xf]
    %v56 = vld [vmem:[#allocation3 + $0x34] sm:$0xf]
    %v57 = vld [vmem:[#allocation3 + $0x38] sm:$0xf]
    %v58 = vld [vmem:[#allocation3 + $0x3c] sm:$0xf]
    %v61 = vunpack.c.l.b16 %v41
    %v62 = vunpack.c.l.b16 %v42
    %v63 = vpack.c.b16 %v62, %v61
    %v81 = vunpack.c.l.b16 %v43
    %v82 = vunpack.c.l.b16 %v44
    %v83 = vunpack.c.l.b16 %v45
    %v84 = vunpack.c.l.b16 %v46
    %v85 = vunpack.c.l.b16 %v47
    %v86 = vunpack.c.l.b16 %v48
    %v87 = vunpack.c.l.b16 %v49
    %v88 = vunpack.c.l.b16 %v50
    %v89 = vunpack.c.l.b16 %v51
    %v90 = vunpack.c.l.b16 %v52
    %v91 = vunpack.c.l.b16 %v53
    %v92 = vunpack.c.l.b16 %v54
    %v93 = vunpack.c.l.b16 %v55
    %v94 = vunpack.c.l.b16 %v56
    %v95 = vunpack.c.l.b16 %v57
    %v96 = vunpack.c.l.b16 %v58
    %v97 = vpack.c.b16 %v82, %v81
    %v98 = vpack.c.b16 %v84, %v83
    %v99 = vpack.c.b16 %v86, %v85
    %v100 = vpack.c.b16 %v88, %v87
    %v101 = vpack.c.b16 %v90, %v89
    %v102 = vpack.c.b16 %v92, %v91
    %v103 = vpack.c.b16 %v94, %v93
    %v104 = vpack.c.b16 %v96, %v95
    %113 = vmatprep.subr.bf16.mxu0 0
    %114 = vmatpush1.bf16.msra.mxu0 %v97
    %115 = vmatprep.subr.bf16.mxu0 0
    %116 = vmatpush1.bf16.msra.mxu0 %v98
    %117 = vmatprep.subr.bf16.mxu0 0
    %118 = vmatpush1.bf16.msra.mxu0 %v99
    %119 = vmatprep.subr.bf16.mxu0 0
    %120 = vmatpush1.bf16.msra.mxu0 %v100
    %121 = vmatprep.subr.bf16.mxu0 0
    %122 = vmatpush1.bf16.msra.mxu0 %v101
    %123 = vmatprep.subr.bf16.mxu0 0
    %124 = vmatpush1.bf16.msra.mxu0 %v102
    %125 = vmatprep.subr.bf16.mxu0 0
    %126 = vmatpush1.bf16.msra.mxu0 %v103
    %127 = vmatprep.subr.bf16.mxu0 0
    %128 = vmatpush1.bf16.msra.mxu0 %v104
    %129 = vmatprep.subr.bf16.mxu0 0
    %130 = vmatpush1.bf16.msra.mxu0 0
    %131 = vmatprep.subr.bf16.mxu0 0
    %132 = vmatpush1.bf16.msra.mxu0 0
    %133 = vmatprep.subr.bf16.mxu0 0
    %134 = vmatpush1.bf16.msra.mxu0 0
    %135 = vmatprep.subr.bf16.mxu0 0
    %136 = vmatpush1.bf16.msra.mxu0 0
    %137 = vmatprep.subr.bf16.mxu0 0
    %138 = vmatpush1.bf16.msra.mxu0 0
    %139 = vmatprep.subr.bf16.mxu0 0
    %140 = vmatpush1.bf16.msra.mxu0 0
    %141 = vmatprep.subr.bf16.mxu0 0
    %142 = vmatpush1.bf16.msra.mxu0 0
    %143 = vmatprep.subr.bf16.mxu0 0
    %144 = vmatpush1.bf16.msra.mxu0 0
    %145 = vmatprep.mubr.bf16.mxu0 0
    %146 = vmatmul.mubr.bf16.gmra.mrb[0].mxu0 %v63
    %v147 = vpop.f32.mrb[0].mxu0
    %v148 = vadd.f32 0.0, %v147
    %v149 = vpop.f32.mrb[0].mxu0
    %v150 = vpop.f32.mrb[0].mxu0
    %v151 = vadd.f32 0.0, %v150
    %v152 = vpop.f32.mrb[0].mxu0
    %153 = vdwg.mxu0
    %v154 = vadd.f32 %v39, %v148
    %v155 = vadd.f32 %v40, %v151
    %156 = vst [vmem:[#allocation2] sm:$0xff] %v154
    %157 = vst [vmem:[#allocation2 + $0x8] sm:$0xff] %v155
    // Predicated region
    $region26: #{tpu_custom_call.1} parent=1 // pred_check
      %p158 = pneg %p33
    $region27: #{tpu_custom_call.1} parent=1 // pred_check_branch
      %160 = sbr.rel (%p158) target = $region29
    $region28: #{tpu_custom_call.1} parent=1 // pred_region
      %v161 = vld [vmem:[#allocation2] sm:$0xff]
      %v162 = vld [vmem:[#allocation2 + $0x8] sm:$0xff]
      %v163 = vld [vmem:[%s2] sm:$0x1]
      %v165 = vlaneseq
      %v166 = vshrl.u32 %v165, 7
      %v167 = vsub.s32 0, %v166
      %v168 = vrot.slane %v163, %v167
      %v170 = vadd.f32 %v161, %v168
      %v171 = vadd.f32 %v162, %v168
      %v172 = vld [vmem:[%s3] sm:$0xff]
      %v173 = vld [vmem:[%s3 + $0x8] sm:$0xff]
      %175 = vset.pattern.permute.xlu0 0
      %176 = vperm.xlu0 %175, %v172
      %v177 = vpop.permute.xlu0 %176
      %180 = vset.pattern.permute.xlu0 0
      %181 = vperm.xlu0 %180, %v173
      %v182 = vpop.permute.xlu0 %181
      %v184 = vmul.f32 %v170, %v177
      %v185 = vmul.f32 %v171, %v182
      %186 = vst [vmem:[#allocation6] sm:$0xff] %v184
      %187 = vst [vmem:[#allocation6 + $0x8] sm:$0xff] %v185
    $region29: #{tpu_custom_call.1} parent=1 // pred_fallthru
      _
    // Predicated region
    $region30: #{tpu_custom_call.1} parent=1 // pred_check
      _
    $region31: #{tpu_custom_call.1} parent=1 // pred_check_branch
      %189 = sbr.rel (0) target = $region33
    $region32: #{tpu_custom_call.1} parent=1 // pred_region
      %s191 = ssub.s32 256, 256
      %192 = vsyncadd [#allocation5], %s191
      %s193 = sshll.u32 [#allocation6], 4
      %s194 = int_to_ptr.vmem [resolvable:$true] %s193
      %199 = dma.vmem_to_hbm [thread:$0]  %s194, 256, %s4, [#allocation5], 128, 128, 8
    $region33: #{tpu_custom_call.1} parent=1 // pred_fallthru
      _
    // Predicated region
    $region34: #{tpu_custom_call.1} parent=1 // pred_check
      _
    $region35: #{tpu_custom_call.1} parent=1 // pred_check_branch
      %201 = sbr.rel (0) target = $region37
    $region36: #{tpu_custom_call.1} parent=1 // pred_region
      %202 = dma.done [#allocation5], 256
    $region37: #{tpu_custom_call.1} parent=1 // pred_fallthru
      _
    %203 = vsyncpa [#allocation4], 1
    %204 = vsyncpa [#allocation5], 1

</llo_original>
